<compile_context>
chip_gen: v6e
topology: v6e:2x2x1
jax: 0.10.0
libtpu: 0.0.40
codegen_flags: <defaults>
</compile_context>

<pallas_src>
import functools

import jax
import jax.numpy as jnp
import numpy as np
from jax.experimental import pallas as pl
from jax.experimental.pallas import tpu as pltpu

BN_EPS = 1e-3                      # initialize_weights() sets BatchNorm2d.eps = 0.001
VMEM_LIMIT = 48 * 1024 * 1024      # explicit scoped-VMEM budget with headroom (fits v7x 64MiB)


def _silu(x):
    return x * jax.nn.sigmoid(x)


def _pick_tile(total, target, multiple):
    """Largest divisor of `total` that is <= target and a multiple of `multiple`."""
    for d in range(min(target, total), 0, -1):
        if total % d == 0 and d % multiple == 0:
            return d
    return total


# --------------------------------------------------------------------------- #
# cv1: 1x1 conv (+ folded BN + SiLU), tiled over rows, emits the two chunks    #
# --------------------------------------------------------------------------- #
def _cv1_kernel(x_ref, wa_ref, wb_ref, ba_ref, bb_ref, oa_ref, ob_ref):
    x = x_ref[...]                                                       # (TM, C1) bf16
    ya = jnp.dot(x, wa_ref[...], preferred_element_type=jnp.float32) + ba_ref[...]
    yb = jnp.dot(x, wb_ref[...], preferred_element_type=jnp.float32) + bb_ref[...]
    oa_ref[...] = _silu(ya).astype(oa_ref.dtype)
    ob_ref[...] = _silu(yb).astype(ob_ref.dtype)


def conv1x1_split(x2d, wa, wb, ba, bb, tile_m):
    """x2d: (M, C1) bf16 -> two (M, c) bf16 chunks (channel split of the 1x1 conv)."""
    M, C1 = x2d.shape
    c = wa.shape[1]
    return pl.pallas_call(
        _cv1_kernel,
        out_shape=(jax.ShapeDtypeStruct((M, c), jnp.bfloat16),
                   jax.ShapeDtypeStruct((M, c), jnp.bfloat16)),
        grid=(M // tile_m,),
        in_specs=[
            pl.BlockSpec((tile_m, C1), lambda i: (i, 0)),
            pl.BlockSpec((C1, c), lambda i: (0, 0)),
            pl.BlockSpec((C1, c), lambda i: (0, 0)),
            pl.BlockSpec((1, c), lambda i: (0, 0)),
            pl.BlockSpec((1, c), lambda i: (0, 0)),
        ],
        out_specs=(pl.BlockSpec((tile_m, c), lambda i: (i, 0)),
                   pl.BlockSpec((tile_m, c), lambda i: (i, 0))),
        compiler_params=pltpu.CompilerParams(
            dimension_semantics=("parallel",),
            vmem_limit_bytes=VMEM_LIMIT),
    )(x2d, wa, wb, ba, bb)


# --------------------------------------------------------------------------- #
# cv2: 1x1 conv over the (never materialized) channel concat:                  #
#      cat(chunks) @ W == sum_i chunk_i @ W_i                                   #
# --------------------------------------------------------------------------- #
def _make_cv2_kernel(n_chunks):
    def kernel(*refs):
        chunk_refs = refs[:n_chunks]
        w_refs = refs[n_chunks:2 * n_chunks]
        bias_ref = refs[2 * n_chunks]
        o_ref = refs[2 * n_chunks + 1]
        acc = jnp.dot(chunk_refs[0][...], w_refs[0][...],
                      preferred_element_type=jnp.float32)
        for i in range(1, n_chunks):
            acc = acc + jnp.dot(chunk_refs[i][...], w_refs[i][...],
                                preferred_element_type=jnp.float32)
        y = acc + bias_ref[...]
        o_ref[...] = _silu(y).astype(o_ref.dtype)
    return kernel


def conv1x1_merge(chunks, w_chunks, bias, c2, tile_m):
    M, c = chunks[0].shape
    n_chunks = len(chunks)
    in_specs = ([pl.BlockSpec((tile_m, c), lambda i: (i, 0)) for _ in range(n_chunks)]
                + [pl.BlockSpec((c, c2), lambda i: (0, 0)) for _ in range(n_chunks)]
                + [pl.BlockSpec((1, c2), lambda i: (0, 0))])
    return pl.pallas_call(
        _make_cv2_kernel(n_chunks),
        out_shape=jax.ShapeDtypeStruct((M, c2), jnp.float32),
        grid=(M // tile_m,),
        in_specs=in_specs,
        out_specs=pl.BlockSpec((tile_m, c2), lambda i: (i, 0)),
        compiler_params=pltpu.CompilerParams(
            dimension_semantics=("parallel",),
            vmem_limit_bytes=VMEM_LIMIT),
    )(*chunks, *w_chunks, bias)


# --------------------------------------------------------------------------- #
# Fused Bottleneck: conv3x3+BN+SiLU -> conv3x3+BN+SiLU (-> + shortcut)          #
# Spatially tiled over (batch, row-blocks); halo rows fetched by a manually     #
# double-buffered DMA; each conv is one im2col matmul.                          #
# --------------------------------------------------------------------------- #
def _im2col3x3(xwin, out_h, out_w):
    rows = []
    for ky in range(3):
        taps = [xwin[ky:ky + out_h, kx:kx + out_w, :] for kx in range(3)]
        rows.append(jnp.concatenate(taps, axis=-1))
    return jnp.concatenate(rows, axis=-1).reshape(out_h * out_w, -1)


def _bottleneck_kernel(x_hbm, w1_ref, b1_ref, w2_ref, b2_ref, o_ref,
                       xbuf, sem, *, H, W, TH, shortcut):
    b = pl.program_id(0)
    j = pl.program_id(1)
    nt = pl.num_programs(1)
    slot = j % 2
    halo_rows = TH + 4

    def dma(jj, sl):
        return pltpu.make_async_copy(
            x_hbm.at[b, pl.ds(jj * TH, halo_rows)], xbuf.at[sl], sem.at[sl])

    # Prime the pipeline at the start of each image's row sweep.
    @pl.when(j == 0)
    def _():
        dma(0, 0).start()

    # Prefetch the next row tile while we compute on the current one.
    @pl.when(j + 1 < nt)
    def _():
        dma(j + 1, 1 - slot).start()

    dma(j, slot).wait()
    xwin = xbuf[slot]                      # (TH+4, W+4, Cin) bf16, 2-deep zero halo

    # conv1 on an extended (TH+2, W+2) region so conv2 has its 1-pixel halo in VMEM.
    hp, wp = TH + 2, W + 2
    p1 = _im2col3x3(xwin, hp, wp)                                   # (hp*wp, 9*Cin)
    t = jnp.dot(p1, w1_ref[...], preferred_element_type=jnp.float32)
    t = _silu(t + b1_ref[...]).reshape(hp, wp, -1)

    # Rows/cols of t that lie outside the real image are conv2's ZERO padding (not conv1
    # evaluated over the padded input) -> mask them to zero.
    row_g = j * TH - 1 + jax.lax.broadcasted_iota(jnp.int32, (hp, wp), 0)
    col_g = jax.lax.broadcasted_iota(jnp.int32, (hp, wp), 1) - 1
    valid = (row_g >= 0) & (row_g < H) & (col_g >= 0) & (col_g < W)
    t = jnp.where(valid[:, :, None], t, 0.0).astype(jnp.bfloat16)

    # conv2 producing the (TH, W) output tile.
    p2 = _im2col3x3(t, TH, W)                                       # (TH*W, 9*Cmid)
    y = jnp.dot(p2, w2_ref[...], preferred_element_type=jnp.float32)
    y = _silu(y + b2_ref[...]).reshape(TH, W, -1)
    if shortcut:
        y = y + xwin[2:2 + TH, 2:2 + W, :].astype(jnp.float32)
    o_ref[...] = y[None].astype(o_ref.dtype)


def bottleneck_fused(x_nhwc, w1, b1, w2, b2, shortcut, block_h):
    """x_nhwc: (N, H, W, Cin) bf16 -> (N, H, W, Cout) bf16 (two fused 3x3 Conv+BN+SiLU)."""
    N, H, W, Cin = x_nhwc.shape
    Cmid = w1.shape[1]
    Cout = w2.shape[1]
    TH = block_h
    assert H % TH == 0
    # Pad once by 2 on each side: the zero halo is both conv1's SAME padding and the
    # spatial halo for the fused row-tiling; it is reused by both convs of the bottleneck.
    xp = jnp.pad(x_nhwc, ((0, 0), (2, 2), (2, 2), (0, 0)))
    kernel = functools.partial(_bottleneck_kernel, H=H, W=W, TH=TH, shortcut=bool(shortcut))
    return pl.pallas_call(
        kernel,
        out_shape=jax.ShapeDtypeStruct((N, H, W, Cout), jnp.bfloat16),
        grid=(N, H // TH),
        in_specs=[
            pl.BlockSpec(memory_space=pl.ANY),                 # raw HBM ref: manual halo DMA
            pl.BlockSpec((9 * Cin, Cmid), lambda b, j: (0, 0)),
            pl.BlockSpec((1, Cmid), lambda b, j: (0, 0)),
            pl.BlockSpec((9 * Cmid, Cout), lambda b, j: (0, 0)),
            pl.BlockSpec((1, Cout), lambda b, j: (0, 0)),
        ],
        out_specs=pl.BlockSpec((1, TH, W, Cout), lambda b, j: (b, j, 0, 0)),
        scratch_shapes=[
            pltpu.VMEM((2, TH + 4, W + 4, Cin), jnp.bfloat16),  # double-buffered halo window
            pltpu.SemaphoreType.DMA((2,)),
        ],
        compiler_params=pltpu.CompilerParams(
            dimension_semantics=("parallel", "arbitrary"),
            vmem_limit_bytes=VMEM_LIMIT),
    )(xp, w1, b1, w2, b2)


# --------------------------------------------------------------------------- #
# Parameter construction (deterministic, mirrors nn.Conv2d + fresh BatchNorm2d)#
# --------------------------------------------------------------------------- #
def make_conv_params(key, c_in, c_out, k):
    fan_in = c_in * k * k
    bound = 1.0 / np.sqrt(fan_in)
    w = jax.random.uniform(key, (k, k, c_in, c_out), jnp.float32, -bound, bound)
    # Folded eval-mode BN with default stats: gamma=1, beta=0, mean=0, var=1.
    scale = jnp.ones((c_out,), jnp.float32) / jnp.sqrt(1.0 + BN_EPS)
    bias = jnp.zeros((c_out,), jnp.float32)
    return dict(w=w, scale=scale, bias=bias)


def _fold(p):
    """Fold the BN scale into the conv weight (host-side)."""
    return p["w"] * p["scale"], p["bias"]


class C2fPallas:
    """Pallas implementation of the C2f forward pass (NCHW in / NCHW out)."""

    def __init__(self, key, c1, c2, n=1, shortcut=False, e=0.5):
        self.c = int(c2 * e)
        self.c2 = c2
        self.n = n
        self.shortcut = bool(shortcut)           # Bottleneck(c, c) -> add = shortcut
        c = self.c
        keys = jax.random.split(key, 2 + 2 * n)
        self.cv1 = make_conv_params(keys[0], c1, 2 * c, 1)
        self.cv2 = make_conv_params(keys[1], (2 + n) * c, c2, 1)
        self.m = []
        for i in range(n):
            p1 = make_conv_params(keys[2 + 2 * i], c, c, 3)
            p2 = make_conv_params(keys[3 + 2 * i], c, c, 3)
            self.m.append((p1, p2))

        # ---- pre-folded bf16 kernel-side parameters (BN scale folded into weights) ----
        w1f, b1f = _fold(self.cv1)
        w1f = w1f[0, 0]                                               # (c1, 2c)
        self.k_cv1 = dict(
            wa=w1f[:, :c].astype(jnp.bfloat16), wb=w1f[:, c:].astype(jnp.bfloat16),
            ba=b1f[:c].reshape(1, c), bb=b1f[c:].reshape(1, c))
        w2f, b2f = _fold(self.cv2)
        w2f = w2f[0, 0]                                               # ((2+n)c, c2)
        self.k_cv2 = dict(
            w_chunks=[w2f[i * c:(i + 1) * c, :].astype(jnp.bfloat16) for i in range(2 + n)],
            bias=b2f.reshape(1, c2))
        self.k_m = []
        for p1, p2 in self.m:
            wf1, bf1 = _fold(p1)
            wf2, bf2 = _fold(p2)
            self.k_m.append(dict(
                w1=wf1.reshape(9 * c, c).astype(jnp.bfloat16), b1=bf1.reshape(1, c),
                w2=wf2.reshape(9 * c, c).astype(jnp.bfloat16), b2=bf2.reshape(1, c)))

    def __call__(self, x_nchw, tile_m=None, block_h=None):
        N, C1, H, W = x_nchw.shape
        c = self.c
        M = N * H * W
        if tile_m is None or M % tile_m or tile_m % 16:
            tile_m = _pick_tile(M, 2048, 16)
        if block_h is None or H % block_h:
            block_h = _pick_tile(H, 32, 1)

        x = jnp.transpose(x_nchw, (0, 2, 3, 1)).astype(jnp.bfloat16)   # NCHW -> NHWC, bf16

        y0, y1 = conv1x1_split(x.reshape(M, C1),
                               self.k_cv1["wa"], self.k_cv1["wb"],
                               self.k_cv1["ba"], self.k_cv1["bb"], tile_m)
        chunks = [y0, y1]
        cur = y1.reshape(N, H, W, c)
        for kp in self.k_m:
            cur = bottleneck_fused(cur, kp["w1"], kp["b1"], kp["w2"], kp["b2"],
                                   self.shortcut, block_h)
            chunks.append(cur.reshape(M, c))

        out2d = conv1x1_merge(chunks, self.k_cv2["w_chunks"], self.k_cv2["bias"],
                              self.c2, tile_m)
        return jnp.transpose(out2d.reshape(N, H, W, self.c2), (0, 3, 1, 2))

    # Pure-JAX (XLA, f32) reference with the same fused eval-mode semantics.
    def reference(self, x_nchw):
        def conv(xx, p, pad):
            y = jax.lax.conv_general_dilated(
                xx, p["w"], (1, 1), [(pad, pad), (pad, pad)],
                dimension_numbers=("NHWC", "HWIO", "NHWC"),
                precision=jax.lax.Precision.HIGHEST,
            )
            y = y * p["scale"] + p["bias"]
            return y * jax.nn.sigmoid(y)

        x = jnp.transpose(x_nchw, (0, 2, 3, 1))
        y = conv(x, self.cv1, 0)
        c = self.c
        ys = [y[..., :c], y[..., c:2 * c]]
        for p1, p2 in self.m:
            t = conv(conv(ys[-1], p1, 1), p2, 1)
            if self.shortcut:
                t = ys[-1] + t
            ys.append(t)
        out = conv(jnp.concatenate(ys, axis=-1), self.cv2, 0)
        return jnp.transpose(out, (0, 3, 1, 2))


if __name__ == "__main__":
    key = jax.random.PRNGKey(0)
    k_x, k_p = jax.random.split(key)

    # C2f(c1=8, c2=8, n=1, shortcut=False, e=0.5) -> hidden c = 4
    N, c1, c2, n = 2, 8, 8, 1
    H = W = 16
    x = jax.random.normal(k_x, (N, c1, H, W), jnp.float32)

    mod = C2fPallas(k_p, c1, c2, n=n, shortcut=False)
    # tile_m=128 / block_h=8 force multi-step grids so the M-tiling and the halo'd
    # row-tiling (double-buffered DMA) paths are exercised at this toy size.
    out = jax.block_until_ready(mod(x, tile_m=128, block_h=8))
    ref = jax.block_until_ready(mod.reference(x))
    assert out.shape == (N, c2, H, W), out.shape
    np.testing.assert_allclose(np.asarray(out), np.asarray(ref), rtol=3e-2, atol=2e-2)

    # Also exercise the fused shortcut path and chained bottlenecks (n=2).
    mod_sc = C2fPallas(jax.random.PRNGKey(1), c1, c2, n=2, shortcut=True)
    out_sc = jax.block_until_ready(mod_sc(x, tile_m=256, block_h=8))
    ref_sc = jax.block_until_ready(mod_sc.reference(x))
    np.testing.assert_allclose(np.asarray(out_sc), np.asarray(ref_sc), rtol=3e-2, atol=2e-2)

    print("KERNEL_OK")
</pallas_src>

<mosaic_0001>
module attributes {stable_mosaic.version = 11 : i64} {
  func.func @_cv1_kernel(%arg0: i32, %arg1: memref<128x8xbf16, #tpu.memory_space<vmem>>, %arg2: memref<8x4xbf16, #tpu.memory_space<vmem>>, %arg3: memref<8x4xbf16, #tpu.memory_space<vmem>>, %arg4: memref<1x4xf32, #tpu.memory_space<vmem>>, %arg5: memref<1x4xf32, #tpu.memory_space<vmem>>, %arg6: memref<128x4xbf16, #tpu.memory_space<vmem>>, %arg7: memref<128x4xbf16, #tpu.memory_space<vmem>>) attributes {dimension_semantics = [#tpu.dimension_semantics<parallel>], iteration_bounds = array<i64: 4>, scalar_prefetch = 0 : i64, scratch_operands = 0 : i64, tpu.core_type = #tpu.core_type<tc>, window_params = [{transform_indices = @transform_0, window_bounds = array<i64: 128, 8>}, {pipeline_mode = #tpu.pipeline_mode<synchronous>, transform_indices = @transform_1, window_bounds = array<i64: 8, 4>}, {pipeline_mode = #tpu.pipeline_mode<synchronous>, transform_indices = @transform_2, window_bounds = array<i64: 8, 4>}, {pipeline_mode = #tpu.pipeline_mode<synchronous>, transform_indices = @transform_3, window_bounds = array<i64: 1, 4>}, {pipeline_mode = #tpu.pipeline_mode<synchronous>, transform_indices = @transform_4, window_bounds = array<i64: 1, 4>}, {transform_indices = @transform_5, window_bounds = array<i64: 128, 4>}, {transform_indices = @transform_6, window_bounds = array<i64: 128, 4>}]} {
    %c0 = arith.constant 0 : index
    %c0_0 = arith.constant 0 : index
    %0 = vector.load %arg1[%c0, %c0_0] : memref<128x8xbf16, #tpu.memory_space<vmem>>, vector<128x8xbf16>
    %c0_1 = arith.constant 0 : index
    %c0_2 = arith.constant 0 : index
    %1 = vector.load %arg2[%c0_1, %c0_2] : memref<8x4xbf16, #tpu.memory_space<vmem>>, vector<8x4xbf16>
    %cst = arith.constant dense<0.000000e+00> : vector<128x4xf32>
    %2 = tpu.matmul %0, %1, %cst {dimension_numbers = #tpu.dot_dimension_numbers<[1], [0], [0], [1], [0, 0, 1, 1], [], []>} : vector<128x8xbf16>, vector<8x4xbf16>, vector<128x4xf32> -> vector<128x4xf32>
    %c0_3 = arith.constant 0 : index
    %c0_4 = arith.constant 0 : index
    %3 = vector.load %arg4[%c0_3, %c0_4] : memref<1x4xf32, #tpu.memory_space<vmem>>, vector<1x4xf32>
    %4 = vector.broadcast %3 : vector<1x4xf32> to vector<128x4xf32>
    %5 = arith.addf %2, %4 : vector<128x4xf32>
    %c0_5 = arith.constant 0 : index
    %c0_6 = arith.constant 0 : index
    %6 = vector.load %arg3[%c0_5, %c0_6] : memref<8x4xbf16, #tpu.memory_space<vmem>>, vector<8x4xbf16>
    %cst_7 = arith.constant dense<0.000000e+00> : vector<128x4xf32>
    %7 = tpu.matmul %0, %6, %cst_7 {dimension_numbers = #tpu.dot_dimension_numbers<[1], [0], [0], [1], [0, 0, 1, 1], [], []>} : vector<128x8xbf16>, vector<8x4xbf16>, vector<128x4xf32> -> vector<128x4xf32>
    %c0_8 = arith.constant 0 : index
    %c0_9 = arith.constant 0 : index
    %8 = vector.load %arg5[%c0_8, %c0_9] : memref<1x4xf32, #tpu.memory_space<vmem>>, vector<1x4xf32>
    %9 = vector.broadcast %8 : vector<1x4xf32> to vector<128x4xf32>
    %10 = arith.addf %7, %9 : vector<128x4xf32>
    %11 = arith.negf %5 : vector<128x4xf32>
    %12 = math.exp %11 : vector<128x4xf32>
    %cst_10 = arith.constant 1.000000e+00 : f32
    %13 = vector.broadcast %cst_10 : f32 to vector<128x4xf32>
    %14 = arith.addf %13, %12 : vector<128x4xf32>
    %15 = arith.divf %13, %14 : vector<128x4xf32>
    %16 = arith.mulf %5, %15 : vector<128x4xf32>
    %17 = arith.truncf %16 : vector<128x4xf32> to vector<128x4xbf16>
    %c0_11 = arith.constant 0 : index
    %c0_12 = arith.constant 0 : index
    %18 = vector.load %arg6[%c0_11, %c0_12] : memref<128x4xbf16, #tpu.memory_space<vmem>>, vector<128x4xbf16>
    tpu.vector_store %arg6[%c0_11, %c0_12], %17 {strides = array<i32>} : memref<128x4xbf16, #tpu.memory_space<vmem>>, vector<128x4xbf16>,
    %19 = arith.negf %10 : vector<128x4xf32>
    %20 = math.exp %19 : vector<128x4xf32>
    %cst_13 = arith.constant 1.000000e+00 : f32
    %21 = vector.broadcast %cst_13 : f32 to vector<128x4xf32>
    %22 = arith.addf %21, %20 : vector<128x4xf32>
    %23 = arith.divf %21, %22 : vector<128x4xf32>
    %24 = arith.mulf %10, %23 : vector<128x4xf32>
    %25 = arith.truncf %24 : vector<128x4xf32> to vector<128x4xbf16>
    %c0_14 = arith.constant 0 : index
    %c0_15 = arith.constant 0 : index
    %26 = vector.load %arg7[%c0_14, %c0_15] : memref<128x4xbf16, #tpu.memory_space<vmem>>, vector<128x4xbf16>
    tpu.vector_store %arg7[%c0_14, %c0_15], %25 {strides = array<i32>} : memref<128x4xbf16, #tpu.memory_space<vmem>>, vector<128x4xbf16>,
    return
  }
  func.func @transform_0(%arg0: i32) -> (i32, i32) {
    %c0_i32 = arith.constant 0 : i32
    %c0_i32_0 = arith.constant 0 : i32
    return %arg0, %c0_i32 : i32, i32
  }
  func.func @transform_1(%arg0: i32) -> (i32, i32) {
    %c0_i32 = arith.constant 0 : i32
    %c0_i32_0 = arith.constant 0 : i32
    %c0_i32_1 = arith.constant 0 : i32
    return %c0_i32, %c0_i32_0 : i32, i32
  }
  func.func @transform_2(%arg0: i32) -> (i32, i32) {
    %c0_i32 = arith.constant 0 : i32
    %c0_i32_0 = arith.constant 0 : i32
    %c0_i32_1 = arith.constant 0 : i32
    return %c0_i32, %c0_i32_0 : i32, i32
  }
  func.func @transform_3(%arg0: i32) -> (i32, i32) {
    %c0_i32 = arith.constant 0 : i32
    %c0_i32_0 = arith.constant 0 : i32
    %c0_i32_1 = arith.constant 0 : i32
    return %c0_i32, %c0_i32_0 : i32, i32
  }
  func.func @transform_4(%arg0: i32) -> (i32, i32) {
    %c0_i32 = arith.constant 0 : i32
    %c0_i32_0 = arith.constant 0 : i32
    %c0_i32_1 = arith.constant 0 : i32
    return %c0_i32, %c0_i32_0 : i32, i32
  }
  func.func @transform_5(%arg0: i32) -> (i32, i32) {
    %c0_i32 = arith.constant 0 : i32
    %c0_i32_0 = arith.constant 0 : i32
    return %arg0, %c0_i32 : i32, i32
  }
  func.func @transform_6(%arg0: i32) -> (i32, i32) {
    %c0_i32 = arith.constant 0 : i32
    %c0_i32_0 = arith.constant 0 : i32
    return %arg0, %c0_i32 : i32, i32
  }
}

</mosaic_0001>

<llo_original>
// kernel: tpu_custom_call.1
$region0: #{tpu_custom_call.1}
  #allocation0 [shape = 'u32[]', space=smem, size = 0x4, offset = 0x4, fixed_abs, tag = 'smem constant byte address 0x4 - core index']
  #allocation1 [shape = 'u32[144,128]{1,0:T(1,128)}', space=vmem, size = 0x12000, scoped, tag = 'internal scratch']
  %s0 = inlined_call_operand.vmem [shape: bf16[512,8], index: 0, kind: input, shape index: {}]
  %s1 = inlined_call_operand.vmem [shape: bf16[8,4], index: 1, kind: input, shape index: {}]
  %s2 = inlined_call_operand.vmem [shape: bf16[8,4], index: 2, kind: input, shape index: {}]
  %s3 = inlined_call_operand.vmem [shape: f32[1,4], index: 3, kind: input, shape index: {}]
  %s4 = inlined_call_operand.vmem [shape: f32[1,4], index: 4, kind: input, shape index: {}]
  %s5 = inlined_call_operand.vmem [shape: bf16[512,4], index: 5, kind: output, shape index: {0}]
  %s6 = inlined_call_operand.vmem [shape: bf16[512,4], index: 6, kind: output, shape index: {1}]
  %7 = xla_tuple %s5, %s6
  %s8 = sld [smem:[#allocation0]]
  $region61: #{tpu_custom_call.1} parent=0
    _
  %s10 = ssub.s32 1, %s8
  %s11 = scalar_select 0, %s10, %s8
  loop: start=0, step=1, limit=6
  $region2: #{tpu_custom_call.1} parent=0 // loop_pre_header
    _
  $region3: #{tpu_custom_call.1} parent=0 // loop_header
    %s13 = sphi 0, %s17
    %p14 = scmp.ge.s32.totalorder %s13, 6
    %s23 = sphi 0, %s25
    %s26 = sphi 0, %s23
    %s27 = sphi 0, %s26
    %s43 = sphi 0, %s27
    %s47 = sphi 0, %s47
    %s49 = sphi 0, %s47
    %s50 = sphi 0, %s49
    %s64 = sphi 0, %s50
    %s68 = sphi 0, %s68
    %s70 = sphi 0, %s68
    %s71 = sphi 0, %s70
    %s85 = sphi 0, %s71
    %s89 = sphi 0, %s89
    %s91 = sphi 0, %s89
    %s92 = sphi 0, %s91
    %s106 = sphi 0, %s92
    %s110 = sphi 0, %s110
    %s112 = sphi 0, %s110
    %s113 = sphi 0, %s112
    %s127 = sphi 0, %s113
    %s133 = sphi 0, %s135
    %s136 = sphi 0, %s133
    %s137 = sphi 0, %s136
    %s153 = sphi 0, %s137
    %s159 = sphi 0, %s161
    %s162 = sphi 0, %s159
    %s163 = sphi 0, %s162
    %s179 = sphi 0, %s163
  $region4: #{tpu_custom_call.1} parent=0 // loop_header_branch
    %16 = sbr.rel (%p14) target = $region8
  $region5: #{tpu_custom_call.1} parent=0 // loop_body
    %s18 = ssub.s32 %s13, 1
    %s19 = ssub.s32 %s13, 2
    %s20 = sadd.s32 %s13, 1
    %s21 = ssub.s32 %s13, %s20
    %p22 = scmp.eq.s32.totalorder %s21, 0
    %s24 = sadd.s32 %s23, 1
    %s25 = scalar_select %p22, %s23, %s24
    %p28 = pneg %p22
    %p29 = scmp.eq.s32.totalorder %s13, 3
    %p30 = por %p28, %p29
    %p31 = scmp.ne.s32.totalorder %s23, %s26
    %p32 = scmp.eq.s32.totalorder %s13, 0
    %p33 = por %p31, %p32
    %p34 = scmp.ne.s32.totalorder %s23, %s26
    %p35 = scmp.eq.s32.totalorder %s18, 3
    %p36 = por %p34, %p35
    %p37 = scmp.ne.s32.totalorder %s26, %s27
    %p38 = scmp.eq.s32.totalorder %s18, 0
    %p39 = por %p37, %p38
    %p40 = scmp.ne.s32.totalorder %s26, %s27
    %p41 = scmp.eq.s32.totalorder %s19, 3
    %p42 = por %p40, %p41
    %p44 = scmp.ne.s32.totalorder %s27, %s43
    %p45 = scmp.eq.s32.totalorder %s19, 0
    %p46 = por %p44, %p45
    %s48 = sadd.s32 %s47, 1
    %p51 = scmp.eq.s32.totalorder %s13, 3
    %p52 = scmp.ne.s32.totalorder %s47, %s49
    %p53 = scmp.eq.s32.totalorder %s13, 0
    %p54 = por %p52, %p53
    %p55 = scmp.ne.s32.totalorder %s47, %s49
    %p56 = scmp.eq.s32.totalorder %s18, 3
    %p57 = por %p55, %p56
    %p58 = scmp.ne.s32.totalorder %s49, %s50
    %p59 = scmp.eq.s32.totalorder %s18, 0
    %p60 = por %p58, %p59
    %p61 = scmp.ne.s32.totalorder %s49, %s50
    %p62 = scmp.eq.s32.totalorder %s19, 3
    %p63 = por %p61, %p62
    %p65 = scmp.ne.s32.totalorder %s50, %s64
    %p66 = scmp.eq.s32.totalorder %s19, 0
    %p67 = por %p65, %p66
    %s69 = sadd.s32 %s68, 1
    %p72 = scmp.eq.s32.totalorder %s13, 3
    %p73 = scmp.ne.s32.totalorder %s68, %s70
    %p74 = scmp.eq.s32.totalorder %s13, 0
    %p75 = por %p73, %p74
    %p76 = scmp.ne.s32.totalorder %s68, %s70
    %p77 = scmp.eq.s32.totalorder %s18, 3
    %p78 = por %p76, %p77
    %p79 = scmp.ne.s32.totalorder %s70, %s71
    %p80 = scmp.eq.s32.totalorder %s18, 0
    %p81 = por %p79, %p80
    %p82 = scmp.ne.s32.totalorder %s70, %s71
    %p83 = scmp.eq.s32.totalorder %s19, 3
    %p84 = por %p82, %p83
    %p86 = scmp.ne.s32.totalorder %s71, %s85
    %p87 = scmp.eq.s32.totalorder %s19, 0
    %p88 = por %p86, %p87
    %s90 = sadd.s32 %s89, 1
    %p93 = scmp.eq.s32.totalorder %s13, 3
    %p94 = scmp.ne.s32.totalorder %s89, %s91
    %p95 = scmp.eq.s32.totalorder %s13, 0
    %p96 = por %p94, %p95
    %p97 = scmp.ne.s32.totalorder %s89, %s91
    %p98 = scmp.eq.s32.totalorder %s18, 3
    %p99 = por %p97, %p98
    %p100 = scmp.ne.s32.totalorder %s91, %s92
    %p101 = scmp.eq.s32.totalorder %s18, 0
    %p102 = por %p100, %p101
    %p103 = scmp.ne.s32.totalorder %s91, %s92
    %p104 = scmp.eq.s32.totalorder %s19, 3
    %p105 = por %p103, %p104
    %p107 = scmp.ne.s32.totalorder %s92, %s106
    %p108 = scmp.eq.s32.totalorder %s19, 0
    %p109 = por %p107, %p108
    %s111 = sadd.s32 %s110, 1
    %p114 = scmp.eq.s32.totalorder %s13, 3
    %p115 = scmp.ne.s32.totalorder %s110, %s112
    %p116 = scmp.eq.s32.totalorder %s13, 0
    %p117 = por %p115, %p116
    %p118 = scmp.ne.s32.totalorder %s110, %s112
    %p119 = scmp.eq.s32.totalorder %s18, 3
    %p120 = por %p118, %p119
    %p121 = scmp.ne.s32.totalorder %s112, %s113
    %p122 = scmp.eq.s32.totalorder %s18, 0
    %p123 = por %p121, %p122
    %p124 = scmp.ne.s32.totalorder %s112, %s113
    %p125 = scmp.eq.s32.totalorder %s19, 3
    %p126 = por %p124, %p125
    %p128 = scmp.ne.s32.totalorder %s113, %s127
    %p129 = scmp.eq.s32.totalorder %s19, 0
    %p130 = por %p128, %p129
    %s131 = ssub.s32 %s13, %s20
    %p132 = scmp.eq.s32.totalorder %s131, 0
    %s134 = sadd.s32 %s133, 1
    %s135 = scalar_select %p132, %s133, %s134
    %p138 = pneg %p132
    %p139 = scmp.eq.s32.totalorder %s13, 3
    %p140 = por %p138, %p139
    %p141 = scmp.ne.s32.totalorder %s133, %s136
    %p142 = scmp.eq.s32.totalorder %s13, 0
    %p143 = por %p141, %p142
    %p144 = scmp.ne.s32.totalorder %s133, %s136
    %p145 = scmp.eq.s32.totalorder %s18, 3
    %p146 = por %p144, %p145
    %p147 = scmp.ne.s32.totalorder %s136, %s137
    %p148 = scmp.eq.s32.totalorder %s18, 0
    %p149 = por %p147, %p148
    %p150 = scmp.ne.s32.totalorder %s136, %s137
    %p151 = scmp.eq.s32.totalorder %s19, 3
    %p152 = por %p150, %p151
    %p154 = scmp.ne.s32.totalorder %s137, %s153
    %p155 = scmp.eq.s32.totalorder %s19, 0
    %p156 = por %p154, %p155
    %s157 = ssub.s32 %s13, %s20
    %p158 = scmp.eq.s32.totalorder %s157, 0
    %s160 = sadd.s32 %s159, 1
    %s161 = scalar_select %p158, %s159, %s160
    %p164 = pneg %p158
    %p165 = scmp.eq.s32.totalorder %s13, 3
    %p166 = por %p164, %p165
    %p167 = scmp.ne.s32.totalorder %s159, %s162
    %p168 = scmp.eq.s32.totalorder %s13, 0
    %p169 = por %p167, %p168
    %p170 = scmp.ne.s32.totalorder %s159, %s162
    %p171 = scmp.eq.s32.totalorder %s18, 3
    %p172 = por %p170, %p171
    %p173 = scmp.ne.s32.totalorder %s162, %s163
    %p174 = scmp.eq.s32.totalorder %s18, 0
    %p175 = por %p173, %p174
    %p176 = scmp.ne.s32.totalorder %s162, %s163
    %p177 = scmp.eq.s32.totalorder %s19, 3
    %p178 = por %p176, %p177
    %p180 = scmp.ne.s32.totalorder %s163, %s179
    %p181 = scmp.eq.s32.totalorder %s19, 0
    %p182 = por %p180, %p181
    %p183 = scmp.le.s32.totalorder 1, %s13
    %p184 = scmp.lt.s32.totalorder %s13, 5
    %p185 = pnand %p183, %p184
    %p186 = pneg %p185
    // Predicated region
    $region9: #{tpu_custom_call.1} parent=5 // pred_check
      _
    $region10: #{tpu_custom_call.1} parent=5 // pred_check_branch
      %188 = sbr.rel (%p185) target = $region12
    $region11: #{tpu_custom_call.1} parent=5 // pred_region
      %s189 = ssub.s32 %s13, 1
      // Predicated region
      $region13: #{tpu_custom_call.1} parent=11 // pred_check
        %p190 = pneg %p60
      $region14: #{tpu_custom_call.1} parent=11 // pred_check_branch
        %192 = sbr.rel (%p190) target = $region16
      $region15: #{tpu_custom_call.1} parent=11 // pred_region
        _
      $region16: #{tpu_custom_call.1} parent=11 // pred_fallthru
        _
      // Predicated region
      $region17: #{tpu_custom_call.1} parent=11 // pred_check
        %p193 = pneg %p81
      $region18: #{tpu_custom_call.1} parent=11 // pred_check_branch
        %195 = sbr.rel (%p193) target = $region20
      $region19: #{tpu_custom_call.1} parent=11 // pred_region
        _
      $region20: #{tpu_custom_call.1} parent=11 // pred_fallthru
        _
      // Predicated region
      $region21: #{tpu_custom_call.1} parent=11 // pred_check
        %p196 = pneg %p102
      $region22: #{tpu_custom_call.1} parent=11 // pred_check_branch
        %198 = sbr.rel (%p196) target = $region24
      $region23: #{tpu_custom_call.1} parent=11 // pred_region
        _
      $region24: #{tpu_custom_call.1} parent=11 // pred_fallthru
        _
      // Predicated region
      $region25: #{tpu_custom_call.1} parent=11 // pred_check
        %p199 = pneg %p123
      $region26: #{tpu_custom_call.1} parent=11 // pred_check_branch
        %201 = sbr.rel (%p199) target = $region28
      $region27: #{tpu_custom_call.1} parent=11 // pred_region
        _
      $region28: #{tpu_custom_call.1} parent=11 // pred_fallthru
        _
    $region12: #{tpu_custom_call.1} parent=5 // pred_fallthru
      _
    %p202 = scmp.lt.s32.totalorder %s13, 4
    // Predicated region
    $region29: #{tpu_custom_call.1} parent=5 // pred_check
      %p203 = pneg %p202
    $region30: #{tpu_custom_call.1} parent=5 // pred_check_branch
      %205 = sbr.rel (%p203) target = $region32
    $region31: #{tpu_custom_call.1} parent=5 // pred_region
      // Predicated region
      $region33: #{tpu_custom_call.1} parent=31 // pred_check
        %p206 = pneg %p33
      $region34: #{tpu_custom_call.1} parent=31 // pred_check_branch
        %208 = sbr.rel (%p206) target = $region36
      $region35: #{tpu_custom_call.1} parent=31 // pred_region
        %s209 = smul.u32 16, %s13
        %p210 = scmp.lt.s32.totalorder %s209, 63
        %s211 = scalar_select %p210, %s209, 63
        %s212 = smul.addr %s211, 4
        %s213 = scalar_lea.vmem %s0, %s212
        %s214 = smul.u32 16, %s13
      $region36: #{tpu_custom_call.1} parent=31 // pred_fallthru
        _
    $region32: #{tpu_custom_call.1} parent=5 // pred_fallthru
      _
    %p215 = scmp.le.s32.totalorder 1, %s13
    %p216 = scmp.lt.s32.totalorder %s13, 5
    %p217 = pnand %p215, %p216
    %p218 = pneg %p217
    // Predicated region
    $region37: #{tpu_custom_call.1} parent=5 // pred_check
      _
    $region38: #{tpu_custom_call.1} parent=5 // pred_check_branch
      %220 = sbr.rel (%p217) target = $region40
    $region39: #{tpu_custom_call.1} parent=5 // pred_region
      %s221 = ssub.s32 %s13, 1
      %s222 = smul.u32 16, %s18
      %p223 = scmp.lt.s32.totalorder %s222, 63
      %s224 = scalar_select %p223, %s222, 63
      %s225 = smul.addr %s224, 4
      %s226 = scalar_lea.vmem %s0, %s225
      %p227 = pneg %p39
      %p228 = pneg %p36
      %p229 = pneg %p60
      %p230 = pneg %p57
      %p231 = pneg %p81
      %p232 = pneg %p78
      %p233 = pneg %p102
      %p234 = pneg %p99
      %p235 = pneg %p123
      %p236 = pneg %p120
      %p237 = pneg %p149
      %p238 = pneg %p146
      %s239 = smul.u32 16, %s18
      %p240 = scmp.lt.s32.totalorder %s239, 63
      %s241 = scalar_select %p240, %s239, 63
      %s242 = smul.addr %s241, 4
      %s243 = scalar_lea.vmem %s5, %s242
      %p244 = pneg %p175
      %p245 = pneg %p172
      %s246 = smul.u32 16, %s18
      %p247 = scmp.lt.s32.totalorder %s246, 63
      %s248 = scalar_select %p247, %s246, 63
      %s249 = smul.addr %s248, 4
      %s250 = scalar_lea.vmem %s6, %s249
      %s251 = smul.u32 16, %s18
      %p252 = scmp.lt.s32.totalorder %s251, 63
      %s253 = scalar_select %p252, %s251, 63
      %s254 = smul.addr %s253, 4
      %s255 = scalar_lea.vmem %s0, %s254
      %s256 = smul.u32 16, %s18
      %s257 = smul.u32 16, %s18
      %p258 = scmp.lt.s32.totalorder %s257, 63
      %s259 = scalar_select %p258, %s257, 63
      %s260 = smul.addr %s259, 4
      %s261 = scalar_lea.vmem %s5, %s260
      %s262 = smul.u32 16, %s18
      %s263 = smul.u32 16, %s18
      %p264 = scmp.lt.s32.totalorder %s263, 63
      %s265 = scalar_select %p264, %s263, 63
      %s266 = smul.addr %s265, 4
      %s267 = scalar_lea.vmem %s6, %s266
      %s268 = smul.u32 16, %s18
      %v270 = vld [vmem:[%s255] sm:$0xf]
      %v271 = vld [vmem:[%s255 + $0x4] sm:$0xf]
      %v272 = vld [vmem:[%s255 + $0x8] sm:$0xf]
      %v273 = vld [vmem:[%s255 + $0xc] sm:$0xf]
      %v274 = vld [vmem:[%s255 + $0x10] sm:$0xf]
      %v275 = vld [vmem:[%s255 + $0x14] sm:$0xf]
      %v276 = vld [vmem:[%s255 + $0x18] sm:$0xf]
      %v277 = vld [vmem:[%s255 + $0x1c] sm:$0xf]
      %v278 = vld [vmem:[%s255 + $0x20] sm:$0xf]
      %v279 = vld [vmem:[%s255 + $0x24] sm:$0xf]
      %v280 = vld [vmem:[%s255 + $0x28] sm:$0xf]
      %v281 = vld [vmem:[%s255 + $0x2c] sm:$0xf]
      %v282 = vld [vmem:[%s255 + $0x30] sm:$0xf]
      %v283 = vld [vmem:[%s255 + $0x34] sm:$0xf]
      %v284 = vld [vmem:[%s255 + $0x38] sm:$0xf]
      %v285 = vld [vmem:[%s255 + $0x3c] sm:$0xf]
      %v286 = vld [vmem:[%s1] sm:$0xf]
      %v287 = vld [vmem:[%s3] sm:$0x1]
      %v289 = vlaneseq
      %v290 = vshrl.u32 %v289, 7
      %v291 = vsub.s32 0, %v290
      %v292 = vrot.slane %v287, %v291
      %v310 = vunpack.c.l.b16 %v270
      %v311 = vunpack.c.l.b16 %v271
      %v312 = vunpack.c.l.b16 %v272
      %v313 = vunpack.c.l.b16 %v273
      %v314 = vunpack.c.l.b16 %v274
      %v315 = vunpack.c.l.b16 %v275
      %v316 = vunpack.c.l.b16 %v276
      %v317 = vunpack.c.l.b16 %v277
      %v318 = vunpack.c.l.b16 %v278
      %v319 = vunpack.c.l.b16 %v279
      %v320 = vunpack.c.l.b16 %v280
      %v321 = vunpack.c.l.b16 %v281
      %v322 = vunpack.c.l.b16 %v282
      %v323 = vunpack.c.l.b16 %v283
      %v324 = vunpack.c.l.b16 %v284
      %v325 = vunpack.c.l.b16 %v285
      %v326 = vpack.c.b16 %v311, %v310
      %v327 = vpack.c.b16 %v313, %v312
      %v328 = vpack.c.b16 %v315, %v314
      %v329 = vpack.c.b16 %v317, %v316
      %v330 = vpack.c.b16 %v319, %v318
      %v331 = vpack.c.b16 %v321, %v320
      %v332 = vpack.c.b16 %v323, %v322
      %v333 = vpack.c.b16 %v325, %v324
      %vm334 = vcmask 64512
      %v336 = vsel %vm334, %v326, 0
      %v339 = vsel %vm334, %v327, 0
      %v342 = vsel %vm334, %v328, 0
      %v345 = vsel %vm334, %v329, 0
      %v348 = vsel %vm334, %v330, 0
      %v351 = vsel %vm334, %v331, 0
      %v354 = vsel %vm334, %v332, 0
      %v357 = vsel %vm334, %v333, 0
      %vm359 = vcmask 1043456
      %v361 = vsel %vm359, %v286, 0
      %363 = vmatprep.subr.bf16.mxu0 0
      %364 = vmatpush1.bf16.msra.mxu0 0
      %365 = vmatprep.subr.bf16.mxu0 0
      %366 = vmatpush1.bf16.msra.mxu0 0
      %367 = vmatprep.subr.bf16.mxu0 0
      %368 = vmatpush1.bf16.msra.mxu0 0
      %369 = vmatprep.subr.bf16.mxu0 0
      %370 = vmatpush1.bf16.msra.mxu0 0
      %371 = vmatprep.subr.bf16.mxu0 0
      %372 = vmatpush1.bf16.msra.mxu0 0
      %373 = vmatprep.subr.bf16.mxu0 0
      %374 = vmatpush1.bf16.msra.mxu0 0
      %375 = vmatprep.subr.bf16.mxu0 0
      %376 = vmatpush1.bf16.msra.mxu0 0
      %377 = vmatprep.subr.bf16.mxu0 0
      %378 = vmatpush1.bf16.msra.mxu0 %v361
      %379 = vmatprep.subr.bf16.mxu0 0
      %380 = vmatpush2.bf16.msra.mxu0 0
      %381 = vmatprep.subr.bf16.mxu0 0
      %382 = vmatpush2.bf16.msra.mxu0 0
      %383 = vmatprep.subr.bf16.mxu0 0
      %384 = vmatpush2.bf16.msra.mxu0 0
      %385 = vmatprep.subr.bf16.mxu0 0
      %386 = vmatpush2.bf16.msra.mxu0 0
      %387 = vmatprep.subr.bf16.mxu0 0
      %388 = vmatpush2.bf16.msra.mxu0 0
      %389 = vmatprep.subr.bf16.mxu0 0
      %390 = vmatpush2.bf16.msra.mxu0 0
      %391 = vmatprep.subr.bf16.mxu0 0
      %392 = vmatpush2.bf16.msra.mxu0 0
      %393 = vmatprep.subr.bf16.mxu0 0
      %394 = vmatpush2.bf16.msra.mxu0 0
      %395 = vmatprep.mubr.bf16.mxu0 0
      %396 = vmatmul.mubr.bf16.gmra.mxu0 %v336
      %v397 = vpop.f32.mrf.mxu0
      %v398 = vadd.f32 %v292, %v397
      %v399 = vpop.f32.mrf.mxu0
      %v400 = vpop.f32.mrf.mxu0
      %v401 = vadd.f32 %v292, %v400
      %v402 = vpop.f32.mrf.mxu0
      %403 = vmatprep.mubr.bf16.mxu0 0
      %404 = vmatmul.mubr.bf16.gmra.mxu0 %v339
      %v405 = vpop.f32.mrf.mxu0
      %v406 = vadd.f32 %v292, %v405
      %v407 = vpop.f32.mrf.mxu0
      %v408 = vpop.f32.mrf.mxu0
      %v409 = vadd.f32 %v292, %v408
      %v410 = vpop.f32.mrf.mxu0
      %411 = vmatprep.mubr.bf16.mxu0 0
      %412 = vmatmul.mubr.bf16.gmra.mxu0 %v342
      %v413 = vpop.f32.mrf.mxu0
      %v414 = vadd.f32 %v292, %v413
      %v415 = vpop.f32.mrf.mxu0
      %v416 = vpop.f32.mrf.mxu0
      %v417 = vadd.f32 %v292, %v416
      %v418 = vpop.f32.mrf.mxu0
      %419 = vmatprep.mubr.bf16.mxu0 0
      %420 = vmatmul.mubr.bf16.gmra.mxu0 %v345
      %v421 = vpop.f32.mrf.mxu0
      %v422 = vadd.f32 %v292, %v421
      %v423 = vpop.f32.mrf.mxu0
      %v424 = vpop.f32.mrf.mxu0
      %v425 = vadd.f32 %v292, %v424
      %v426 = vpop.f32.mrf.mxu0
      %427 = vmatprep.mubr.bf16.mxu0 0
      %428 = vmatmul.mubr.bf16.gmra.mxu0 %v348
      %v429 = vpop.f32.mrf.mxu0
      %v430 = vadd.f32 %v292, %v429
      %v431 = vpop.f32.mrf.mxu0
      %v432 = vpop.f32.mrf.mxu0
      %v433 = vadd.f32 %v292, %v432
      %v434 = vpop.f32.mrf.mxu0
      %435 = vmatprep.mubr.bf16.mxu0 0
      %436 = vmatmul.mubr.bf16.gmra.mxu0 %v351
      %v437 = vpop.f32.mrf.mxu0
      %v438 = vadd.f32 %v292, %v437
      %v439 = vpop.f32.mrf.mxu0
      %v440 = vpop.f32.mrf.mxu0
      %v441 = vadd.f32 %v292, %v440
      %v442 = vpop.f32.mrf.mxu0
      %443 = vmatprep.mubr.bf16.mxu0 0
      %444 = vmatmul.mubr.bf16.gmra.mxu0 %v354
      %v445 = vpop.f32.mrf.mxu0
      %v446 = vadd.f32 %v292, %v445
      %v447 = vpop.f32.mrf.mxu0
      %v448 = vpop.f32.mrf.mxu0
      %v449 = vadd.f32 %v292, %v448
      %v450 = vpop.f32.mrf.mxu0
      %451 = vmatprep.mubr.bf16.mxu0 0
      %452 = vmatmul.mubr.bf16.gmra.mxu0 %v357
      %v453 = vpop.f32.mrf.mxu0
      %v454 = vadd.f32 %v292, %v453
      %v455 = vpop.f32.mrf.mxu0
      %v456 = vpop.f32.mrf.mxu0
      %v457 = vadd.f32 %v292, %v456
      %v458 = vpop.f32.mrf.mxu0
      %459 = vdwg.mxu0
      %v460 = vld [vmem:[%s2] sm:$0xf]
      %v461 = vld [vmem:[%s4] sm:$0x1]
      %v463 = vlaneseq
      %v464 = vshrl.u32 %v463, 7
      %v465 = vsub.s32 0, %v464
      %v466 = vrot.slane %v461, %v465
      %v469 = vsel %vm359, %v460, 0
      %471 = vmatprep.subr.bf16.mxu0 0
      %472 = vmatpush1.bf16.msra.mxu0 0
      %473 = vmatprep.subr.bf16.mxu0 0
      %474 = vmatpush1.bf16.msra.mxu0 0
      %475 = vmatprep.subr.bf16.mxu0 0
      %476 = vmatpush1.bf16.msra.mxu0 0
      %477 = vmatprep.subr.bf16.mxu0 0
      %478 = vmatpush1.bf16.msra.mxu0 0
      %479 = vmatprep.subr.bf16.mxu0 0
      %480 = vmatpush1.bf16.msra.mxu0 0
      %481 = vmatprep.subr.bf16.mxu0 0
      %482 = vmatpush1.bf16.msra.mxu0 0
      %483 = vmatprep.subr.bf16.mxu0 0
      %484 = vmatpush1.bf16.msra.mxu0 0
      %485 = vmatprep.subr.bf16.mxu0 0
      %486 = vmatpush1.bf16.msra.mxu0 %v469
      %487 = vmatprep.subr.bf16.mxu0 0
      %488 = vmatpush2.bf16.msra.mxu0 0
      %489 = vmatprep.subr.bf16.mxu0 0
      %490 = vmatpush2.bf16.msra.mxu0 0
      %491 = vmatprep.subr.bf16.mxu0 0
      %492 = vmatpush2.bf16.msra.mxu0 0
      %493 = vmatprep.subr.bf16.mxu0 0
      %494 = vmatpush2.bf16.msra.mxu0 0
      %495 = vmatprep.subr.bf16.mxu0 0
      %496 = vmatpush2.bf16.msra.mxu0 0
      %497 = vmatprep.subr.bf16.mxu0 0
      %498 = vmatpush2.bf16.msra.mxu0 0
      %499 = vmatprep.subr.bf16.mxu0 0
      %500 = vmatpush2.bf16.msra.mxu0 0
      %501 = vmatprep.subr.bf16.mxu0 0
      %502 = vmatpush2.bf16.msra.mxu0 0
      %503 = vmatprep.mubr.bf16.mxu0 0
      %504 = vmatmul.mubr.bf16.gmra.mxu0 %v336
      %v505 = vpop.f32.mrf.mxu0
      %v506 = vadd.f32 %v466, %v505
      %v507 = vpop.f32.mrf.mxu0
      %v508 = vpop.f32.mrf.mxu0
      %v509 = vadd.f32 %v466, %v508
      %v510 = vpop.f32.mrf.mxu0
      %511 = vmatprep.mubr.bf16.mxu0 0
      %512 = vmatmul.mubr.bf16.gmra.mxu0 %v339
      %v513 = vpop.f32.mrf.mxu0
      %v514 = vadd.f32 %v466, %v513
      %v515 = vpop.f32.mrf.mxu0
      %v516 = vpop.f32.mrf.mxu0
      %v517 = vadd.f32 %v466, %v516
      %v518 = vpop.f32.mrf.mxu0
      %519 = vmatprep.mubr.bf16.mxu0 0
      %520 = vmatmul.mubr.bf16.gmra.mxu0 %v342
      %v521 = vpop.f32.mrf.mxu0
      %v522 = vadd.f32 %v466, %v521
      %v523 = vpop.f32.mrf.mxu0
      %v524 = vpop.f32.mrf.mxu0
      %v525 = vadd.f32 %v466, %v524
      %v526 = vpop.f32.mrf.mxu0
      %527 = vmatprep.mubr.bf16.mxu0 0
      %528 = vmatmul.mubr.bf16.gmra.mxu0 %v345
      %v529 = vpop.f32.mrf.mxu0
      %v530 = vadd.f32 %v466, %v529
      %v531 = vpop.f32.mrf.mxu0
      %v532 = vpop.f32.mrf.mxu0
      %v533 = vadd.f32 %v466, %v532
      %v534 = vpop.f32.mrf.mxu0
      %535 = vmatprep.mubr.bf16.mxu0 0
      %536 = vmatmul.mubr.bf16.gmra.mxu0 %v348
      %v537 = vpop.f32.mrf.mxu0
      %v538 = vadd.f32 %v466, %v537
      %v539 = vpop.f32.mrf.mxu0
      %v540 = vpop.f32.mrf.mxu0
      %v541 = vadd.f32 %v466, %v540
      %v542 = vpop.f32.mrf.mxu0
      %543 = vmatprep.mubr.bf16.mxu0 0
      %544 = vmatmul.mubr.bf16.gmra.mxu0 %v351
      %v545 = vpop.f32.mrf.mxu0
      %v546 = vadd.f32 %v466, %v545
      %v547 = vpop.f32.mrf.mxu0
      %v548 = vpop.f32.mrf.mxu0
      %v549 = vadd.f32 %v466, %v548
      %v550 = vpop.f32.mrf.mxu0
      %551 = vmatprep.mubr.bf16.mxu0 0
      %552 = vmatmul.mubr.bf16.gmra.mxu0 %v354
      %v553 = vpop.f32.mrf.mxu0
      %v554 = vadd.f32 %v466, %v553
      %v555 = vpop.f32.mrf.mxu0
      %v556 = vpop.f32.mrf.mxu0
      %v557 = vadd.f32 %v466, %v556
      %v558 = vpop.f32.mrf.mxu0
      %559 = vmatprep.mubr.bf16.mxu0 0
      %560 = vmatmul.mubr.bf16.gmra.mxu0 %v357
      %v561 = vpop.f32.mrf.mxu0
      %v562 = vadd.f32 %v466, %v561
      %v563 = vpop.f32.mrf.mxu0
      %v564 = vpop.f32.mrf.mxu0
      %v565 = vadd.f32 %v466, %v564
      %v566 = vpop.f32.mrf.mxu0
      %567 = vdwg.mxu0
      %v568 = vxor.u32 %v398, 2147483648
      %v569 = vxor.u32 %v401, 2147483648
      %v570 = vxor.u32 %v406, 2147483648
      %v571 = vxor.u32 %v409, 2147483648
      %v572 = vxor.u32 %v414, 2147483648
      %v573 = vxor.u32 %v417, 2147483648
      %v574 = vxor.u32 %v422, 2147483648
      %v575 = vxor.u32 %v425, 2147483648
      %v576 = vxor.u32 %v430, 2147483648
      %v577 = vxor.u32 %v433, 2147483648
      %v578 = vxor.u32 %v438, 2147483648
      %v579 = vxor.u32 %v441, 2147483648
      %v580 = vxor.u32 %v446, 2147483648
      %v581 = vxor.u32 %v449, 2147483648
      %v582 = vxor.u32 %v454, 2147483648
      %v583 = vxor.u32 %v457, 2147483648
      %v584 = vmul.f32 %v568, 1.442695
      %v585 = vpow.pop %v584
      %v586 = vmul.f32 %v569, 1.442695
      %v587 = vpow.pop %v586
      %v588 = vmul.f32 %v570, 1.442695
      %v589 = vpow.pop %v588
      %v590 = vmul.f32 %v571, 1.442695
      %v591 = vpow.pop %v590
      %v592 = vmul.f32 %v572, 1.442695
      %v593 = vpow.pop %v592
      %v594 = vmul.f32 %v573, 1.442695
      %v595 = vpow.pop %v594
      %v596 = vmul.f32 %v574, 1.442695
      %v597 = vpow.pop %v596
      %v598 = vmul.f32 %v575, 1.442695
      %v599 = vpow.pop %v598
      %v600 = vmul.f32 %v576, 1.442695
      %v601 = vpow.pop %v600
      %v602 = vmul.f32 %v577, 1.442695
      %v603 = vpow.pop %v602
      %v604 = vmul.f32 %v578, 1.442695
      %v605 = vpow.pop %v604
      %v606 = vmul.f32 %v579, 1.442695
      %v607 = vpow.pop %v606
      %v608 = vmul.f32 %v580, 1.442695
      %v609 = vpow.pop %v608
      %v610 = vmul.f32 %v581, 1.442695
      %v611 = vpow.pop %v610
      %v612 = vmul.f32 %v582, 1.442695
      %v613 = vpow.pop %v612
      %v614 = vmul.f32 %v583, 1.442695
      %v615 = vpow.pop %v614
      %v616 = vadd.f32 %v585, 1.0
      %v617 = vadd.f32 %v587, 1.0
      %v618 = vadd.f32 %v589, 1.0
      %v619 = vadd.f32 %v591, 1.0
      %v620 = vadd.f32 %v593, 1.0
      %v621 = vadd.f32 %v595, 1.0
      %v622 = vadd.f32 %v597, 1.0
      %v623 = vadd.f32 %v599, 1.0
      %v624 = vadd.f32 %v601, 1.0
      %v625 = vadd.f32 %v603, 1.0
      %v626 = vadd.f32 %v605, 1.0
      %v627 = vadd.f32 %v607, 1.0
      %v628 = vadd.f32 %v609, 1.0
      %v629 = vadd.f32 %v611, 1.0
      %v630 = vadd.f32 %v613, 1.0
      %v631 = vadd.f32 %v615, 1.0
      %v632 = vrcp.pop %v616
      %v633 = vmul.f32 1.0, %v632
      %v634 = vrcp.pop %v617
      %v635 = vmul.f32 1.0, %v634
      %v636 = vrcp.pop %v618
      %v637 = vmul.f32 1.0, %v636
      %v638 = vrcp.pop %v619
      %v639 = vmul.f32 1.0, %v638
      %v640 = vrcp.pop %v620
      %v641 = vmul.f32 1.0, %v640
      %v642 = vrcp.pop %v621
      %v643 = vmul.f32 1.0, %v642
      %v644 = vrcp.pop %v622
      %v645 = vmul.f32 1.0, %v644
      %v646 = vrcp.pop %v623
      %v647 = vmul.f32 1.0, %v646
      %v648 = vrcp.pop %v624
      %v649 = vmul.f32 1.0, %v648
      %v650 = vrcp.pop %v625
      %v651 = vmul.f32 1.0, %v650
      %v652 = vrcp.pop %v626
      %v653 = vmul.f32 1.0, %v652
      %v654 = vrcp.pop %v627
      %v655 = vmul.f32 1.0, %v654
      %v656 = vrcp.pop %v628
      %v657 = vmul.f32 1.0, %v656
      %v658 = vrcp.pop %v629
      %v659 = vmul.f32 1.0, %v658
      %v660 = vrcp.pop %v630
      %v661 = vmul.f32 1.0, %v660
      %v662 = vrcp.pop %v631
      %v663 = vmul.f32 1.0, %v662
      %v664 = vmul.f32 %v398, %v633
      %v665 = vmul.f32 %v401, %v635
      %v666 = vmul.f32 %v406, %v637
      %v667 = vmul.f32 %v409, %v639
      %v668 = vmul.f32 %v414, %v641
      %v669 = vmul.f32 %v417, %v643
      %v670 = vmul.f32 %v422, %v645
      %v671 = vmul.f32 %v425, %v647
      %v672 = vmul.f32 %v430, %v649
      %v673 = vmul.f32 %v433, %v651
      %v674 = vmul.f32 %v438, %v653
      %v675 = vmul.f32 %v441, %v655
      %v676 = vmul.f32 %v446, %v657
      %v677 = vmul.f32 %v449, %v659
      %v678 = vmul.f32 %v454, %v661
      %v679 = vmul.f32 %v457, %v663
      %v680 = vpack.c.bf16 %v665, %v664
      %v681 = vpack.c.bf16 %v667, %v666
      %v682 = vpack.c.bf16 %v669, %v668
      %v683 = vpack.c.bf16 %v671, %v670
      %v684 = vpack.c.bf16 %v673, %v672
      %v685 = vpack.c.bf16 %v675, %v674
      %v686 = vpack.c.bf16 %v677, %v676
      %v687 = vpack.c.bf16 %v679, %v678
      %v696 = vunpack.c.l.b16 %v680
      %v697 = vunpack.c.h.b16 %v680
      %v698 = vunpack.c.l.b16 %v681
      %v699 = vunpack.c.h.b16 %v681
      %v700 = vunpack.c.l.b16 %v682
      %v701 = vunpack.c.h.b16 %v682
      %v702 = vunpack.c.l.b16 %v683
      %v703 = vunpack.c.h.b16 %v683
      %v704 = vunpack.c.l.b16 %v684
      %v705 = vunpack.c.h.b16 %v684
      %v706 = vunpack.c.l.b16 %v685
      %v707 = vunpack.c.h.b16 %v685
      %v708 = vunpack.c.l.b16 %v686
      %v709 = vunpack.c.h.b16 %v686
      %v710 = vunpack.c.l.b16 %v687
      %v711 = vunpack.c.h.b16 %v687
      %v712 = vpack.c.b16 %v696, %v696
      %v713 = vpack.c.b16 %v697, %v697
      %v714 = vpack.c.b16 %v698, %v698
      %v715 = vpack.c.b16 %v699, %v699
      %v716 = vpack.c.b16 %v700, %v700
      %v717 = vpack.c.b16 %v701, %v701
      %v718 = vpack.c.b16 %v702, %v702
      %v719 = vpack.c.b16 %v703, %v703
      %v720 = vpack.c.b16 %v704, %v704
      %v721 = vpack.c.b16 %v705, %v705
      %v722 = vpack.c.b16 %v706, %v706
      %v723 = vpack.c.b16 %v707, %v707
      %v724 = vpack.c.b16 %v708, %v708
      %v725 = vpack.c.b16 %v709, %v709
      %v726 = vpack.c.b16 %v710, %v710
      %v727 = vpack.c.b16 %v711, %v711
      %vm744 = vcmask 27648
      %745 = vst.msk [vmem:[%s261] sm:$0xf] %vm744, %v712
      %746 = vst.msk [vmem:[%s261 + $0x4] sm:$0xf] %vm744, %v713
      %747 = vst.msk [vmem:[%s261 + $0x8] sm:$0xf] %vm744, %v714
      %748 = vst.msk [vmem:[%s261 + $0xc] sm:$0xf] %vm744, %v715
      %749 = vst.msk [vmem:[%s261 + $0x10] sm:$0xf] %vm744, %v716
      %750 = vst.msk [vmem:[%s261 + $0x14] sm:$0xf] %vm744, %v717
      %751 = vst.msk [vmem:[%s261 + $0x18] sm:$0xf] %vm744, %v718
      %752 = vst.msk [vmem:[%s261 + $0x1c] sm:$0xf] %vm744, %v719
      %753 = vst.msk [vmem:[%s261 + $0x20] sm:$0xf] %vm744, %v720
      %754 = vst.msk [vmem:[%s261 + $0x24] sm:$0xf] %vm744, %v721
      %755 = vst.msk [vmem:[%s261 + $0x28] sm:$0xf] %vm744, %v722
      %756 = vst.msk [vmem:[%s261 + $0x2c] sm:$0xf] %vm744, %v723
      %757 = vst.msk [vmem:[%s261 + $0x30] sm:$0xf] %vm744, %v724
      %758 = vst.msk [vmem:[%s261 + $0x34] sm:$0xf] %vm744, %v725
      %759 = vst.msk [vmem:[%s261 + $0x38] sm:$0xf] %vm744, %v726
      %760 = vst.msk [vmem:[%s261 + $0x3c] sm:$0xf] %vm744, %v727
      %v761 = vxor.u32 %v506, 2147483648
      %v762 = vxor.u32 %v509, 2147483648
      %v763 = vxor.u32 %v514, 2147483648
      %v764 = vxor.u32 %v517, 2147483648
      %v765 = vxor.u32 %v522, 2147483648
      %v766 = vxor.u32 %v525, 2147483648
      %v767 = vxor.u32 %v530, 2147483648
      %v768 = vxor.u32 %v533, 2147483648
      %v769 = vxor.u32 %v538, 2147483648
      %v770 = vxor.u32 %v541, 2147483648
      %v771 = vxor.u32 %v546, 2147483648
      %v772 = vxor.u32 %v549, 2147483648
      %v773 = vxor.u32 %v554, 2147483648
      %v774 = vxor.u32 %v557, 2147483648
      %v775 = vxor.u32 %v562, 2147483648
      %v776 = vxor.u32 %v565, 2147483648
      %v777 = vmul.f32 %v761, 1.442695
      %v778 = vpow.pop %v777
      %v779 = vmul.f32 %v762, 1.442695
      %v780 = vpow.pop %v779
      %v781 = vmul.f32 %v763, 1.442695
      %v782 = vpow.pop %v781
      %v783 = vmul.f32 %v764, 1.442695
      %v784 = vpow.pop %v783
      %v785 = vmul.f32 %v765, 1.442695
      %v786 = vpow.pop %v785
      %v787 = vmul.f32 %v766, 1.442695
      %v788 = vpow.pop %v787
      %v789 = vmul.f32 %v767, 1.442695
      %v790 = vpow.pop %v789
      %v791 = vmul.f32 %v768, 1.442695
      %v792 = vpow.pop %v791
      %v793 = vmul.f32 %v769, 1.442695
      %v794 = vpow.pop %v793
      %v795 = vmul.f32 %v770, 1.442695
      %v796 = vpow.pop %v795
      %v797 = vmul.f32 %v771, 1.442695
      %v798 = vpow.pop %v797
      %v799 = vmul.f32 %v772, 1.442695
      %v800 = vpow.pop %v799
      %v801 = vmul.f32 %v773, 1.442695
      %v802 = vpow.pop %v801
      %v803 = vmul.f32 %v774, 1.442695
      %v804 = vpow.pop %v803
      %v805 = vmul.f32 %v775, 1.442695
      %v806 = vpow.pop %v805
      %v807 = vmul.f32 %v776, 1.442695
      %v808 = vpow.pop %v807
      %v809 = vadd.f32 %v778, 1.0
      %v810 = vadd.f32 %v780, 1.0
      %v811 = vadd.f32 %v782, 1.0
      %v812 = vadd.f32 %v784, 1.0
      %v813 = vadd.f32 %v786, 1.0
      %v814 = vadd.f32 %v788, 1.0
      %v815 = vadd.f32 %v790, 1.0
      %v816 = vadd.f32 %v792, 1.0
      %v817 = vadd.f32 %v794, 1.0
      %v818 = vadd.f32 %v796, 1.0
      %v819 = vadd.f32 %v798, 1.0
      %v820 = vadd.f32 %v800, 1.0
      %v821 = vadd.f32 %v802, 1.0
      %v822 = vadd.f32 %v804, 1.0
      %v823 = vadd.f32 %v806, 1.0
      %v824 = vadd.f32 %v808, 1.0
      %v825 = vrcp.pop %v809
      %v826 = vmul.f32 1.0, %v825
      %v827 = vrcp.pop %v810
      %v828 = vmul.f32 1.0, %v827
      %v829 = vrcp.pop %v811
      %v830 = vmul.f32 1.0, %v829
      %v831 = vrcp.pop %v812
      %v832 = vmul.f32 1.0, %v831
      %v833 = vrcp.pop %v813
      %v834 = vmul.f32 1.0, %v833
      %v835 = vrcp.pop %v814
      %v836 = vmul.f32 1.0, %v835
      %v837 = vrcp.pop %v815
      %v838 = vmul.f32 1.0, %v837
      %v839 = vrcp.pop %v816
      %v840 = vmul.f32 1.0, %v839
      %v841 = vrcp.pop %v817
      %v842 = vmul.f32 1.0, %v841
      %v843 = vrcp.pop %v818
      %v844 = vmul.f32 1.0, %v843
      %v845 = vrcp.pop %v819
      %v846 = vmul.f32 1.0, %v845
      %v847 = vrcp.pop %v820
      %v848 = vmul.f32 1.0, %v847
      %v849 = vrcp.pop %v821
      %v850 = vmul.f32 1.0, %v849
      %v851 = vrcp.pop %v822
      %v852 = vmul.f32 1.0, %v851
      %v853 = vrcp.pop %v823
      %v854 = vmul.f32 1.0, %v853
      %v855 = vrcp.pop %v824
      %v856 = vmul.f32 1.0, %v855
      %v857 = vmul.f32 %v506, %v826
      %v858 = vmul.f32 %v509, %v828
      %v859 = vmul.f32 %v514, %v830
      %v860 = vmul.f32 %v517, %v832
      %v861 = vmul.f32 %v522, %v834
      %v862 = vmul.f32 %v525, %v836
      %v863 = vmul.f32 %v530, %v838
      %v864 = vmul.f32 %v533, %v840
      %v865 = vmul.f32 %v538, %v842
      %v866 = vmul.f32 %v541, %v844
      %v867 = vmul.f32 %v546, %v846
      %v868 = vmul.f32 %v549, %v848
      %v869 = vmul.f32 %v554, %v850
      %v870 = vmul.f32 %v557, %v852
      %v871 = vmul.f32 %v562, %v854
      %v872 = vmul.f32 %v565, %v856
      %v873 = vpack.c.bf16 %v858, %v857
      %v874 = vpack.c.bf16 %v860, %v859
      %v875 = vpack.c.bf16 %v862, %v861
      %v876 = vpack.c.bf16 %v864, %v863
      %v877 = vpack.c.bf16 %v866, %v865
      %v878 = vpack.c.bf16 %v868, %v867
      %v879 = vpack.c.bf16 %v870, %v869
      %v880 = vpack.c.bf16 %v872, %v871
      %v889 = vunpack.c.l.b16 %v873
      %v890 = vunpack.c.h.b16 %v873
      %v891 = vunpack.c.l.b16 %v874
      %v892 = vunpack.c.h.b16 %v874
      %v893 = vunpack.c.l.b16 %v875
      %v894 = vunpack.c.h.b16 %v875
      %v895 = vunpack.c.l.b16 %v876
      %v896 = vunpack.c.h.b16 %v876
      %v897 = vunpack.c.l.b16 %v877
      %v898 = vunpack.c.h.b16 %v877
      %v899 = vunpack.c.l.b16 %v878
      %v900 = vunpack.c.h.b16 %v878
      %v901 = vunpack.c.l.b16 %v879
      %v902 = vunpack.c.h.b16 %v879
      %v903 = vunpack.c.l.b16 %v880
      %v904 = vunpack.c.h.b16 %v880
      %v905 = vpack.c.b16 %v889, %v889
      %v906 = vpack.c.b16 %v890, %v890
      %v907 = vpack.c.b16 %v891, %v891
      %v908 = vpack.c.b16 %v892, %v892
      %v909 = vpack.c.b16 %v893, %v893
      %v910 = vpack.c.b16 %v894, %v894
      %v911 = vpack.c.b16 %v895, %v895
      %v912 = vpack.c.b16 %v896, %v896
      %v913 = vpack.c.b16 %v897, %v897
      %v914 = vpack.c.b16 %v898, %v898
      %v915 = vpack.c.b16 %v899, %v899
      %v916 = vpack.c.b16 %v900, %v900
      %v917 = vpack.c.b16 %v901, %v901
      %v918 = vpack.c.b16 %v902, %v902
      %v919 = vpack.c.b16 %v903, %v903
      %v920 = vpack.c.b16 %v904, %v904
      %937 = vst.msk [vmem:[%s267] sm:$0xf] %vm744, %v905
      %938 = vst.msk [vmem:[%s267 + $0x4] sm:$0xf] %vm744, %v906
      %939 = vst.msk [vmem:[%s267 + $0x8] sm:$0xf] %vm744, %v907
      %940 = vst.msk [vmem:[%s267 + $0xc] sm:$0xf] %vm744, %v908
      %941 = vst.msk [vmem:[%s267 + $0x10] sm:$0xf] %vm744, %v909
      %942 = vst.msk [vmem:[%s267 + $0x14] sm:$0xf] %vm744, %v910
      %943 = vst.msk [vmem:[%s267 + $0x18] sm:$0xf] %vm744, %v911
      %944 = vst.msk [vmem:[%s267 + $0x1c] sm:$0xf] %vm744, %v912
      %945 = vst.msk [vmem:[%s267 + $0x20] sm:$0xf] %vm744, %v913
      %946 = vst.msk [vmem:[%s267 + $0x24] sm:$0xf] %vm744, %v914
      %947 = vst.msk [vmem:[%s267 + $0x28] sm:$0xf] %vm744, %v915
      %948 = vst.msk [vmem:[%s267 + $0x2c] sm:$0xf] %vm744, %v916
      %949 = vst.msk [vmem:[%s267 + $0x30] sm:$0xf] %vm744, %v917
      %950 = vst.msk [vmem:[%s267 + $0x34] sm:$0xf] %vm744, %v918
      %951 = vst.msk [vmem:[%s267 + $0x38] sm:$0xf] %vm744, %v919
      %952 = vst.msk [vmem:[%s267 + $0x3c] sm:$0xf] %vm744, %v920
      %s953 = smul.u32 16, %s18
      %p954 = scmp.lt.s32.totalorder %s953, 63
      %s955 = scalar_select %p954, %s953, 63
      %s956 = smul.addr %s955, 4
      %s957 = scalar_lea.vmem %s5, %s956
      %s958 = smul.u32 16, %s18
      %p959 = scmp.lt.s32.totalorder %s958, 63
      %s960 = scalar_select %p959, %s958, 63
      %s961 = smul.addr %s960, 4
      %s962 = scalar_lea.vmem %s6, %s961
      // Predicated region
      $region41: #{tpu_custom_call.1} parent=39 // pred_check
        %p963 = pneg %p146
      $region42: #{tpu_custom_call.1} parent=39 // pred_check_branch
        %965 = sbr.rel (%p963) target = $region44
      $region43: #{tpu_custom_call.1} parent=39 // pred_region
        %s966 = smul.u32 16, %s18
      $region44: #{tpu_custom_call.1} parent=39 // pred_fallthru
        _
      // Predicated region
      $region45: #{tpu_custom_call.1} parent=39 // pred_check
        %p967 = pneg %p172
      $region46: #{tpu_custom_call.1} parent=39 // pred_check_branch
        %969 = sbr.rel (%p967) target = $region48
      $region47: #{tpu_custom_call.1} parent=39 // pred_region
        %s970 = smul.u32 16, %s18
      $region48: #{tpu_custom_call.1} parent=39 // pred_fallthru
        _
    $region40: #{tpu_custom_call.1} parent=5 // pred_fallthru
      _
    %p971 = scmp.le.s32.totalorder 2, %s13
    // Predicated region
    $region49: #{tpu_custom_call.1} parent=5 // pred_check
      %p972 = pneg %p971
    $region50: #{tpu_custom_call.1} parent=5 // pred_check_branch
      %974 = sbr.rel (%p972) target = $region52
    $region51: #{tpu_custom_call.1} parent=5 // pred_region
      %s975 = ssub.s32 %s13, 2
      // Predicated region
      $region53: #{tpu_custom_call.1} parent=51 // pred_check
        %p976 = pneg %p152
      $region54: #{tpu_custom_call.1} parent=51 // pred_check_branch
        %978 = sbr.rel (%p976) target = $region56
      $region55: #{tpu_custom_call.1} parent=51 // pred_region
        %s979 = smul.u32 16, %s19
        %p980 = scmp.lt.s32.totalorder %s979, 63
        %s981 = scalar_select %p980, %s979, 63
        %s982 = smul.addr %s981, 4
        %s983 = scalar_lea.vmem %s5, %s982
      $region56: #{tpu_custom_call.1} parent=51 // pred_fallthru
        _
      // Predicated region
      $region57: #{tpu_custom_call.1} parent=51 // pred_check
        %p984 = pneg %p178
      $region58: #{tpu_custom_call.1} parent=51 // pred_check_branch
        %986 = sbr.rel (%p984) target = $region60
      $region59: #{tpu_custom_call.1} parent=51 // pred_region
        %s987 = smul.u32 16, %s19
        %p988 = scmp.lt.s32.totalorder %s987, 63
        %s989 = scalar_select %p988, %s987, 63
        %s990 = smul.addr %s989, 4
        %s991 = scalar_lea.vmem %s6, %s990
      $region60: #{tpu_custom_call.1} parent=51 // pred_fallthru
        _
    $region52: #{tpu_custom_call.1} parent=5 // pred_fallthru
      _
  $region6: #{tpu_custom_call.1} parent=0 // loop_footer
    %s17 = sadd.s32 1, %s13
  $region7: #{tpu_custom_call.1} parent=0 // loop_footer_branch
    %12 = sbr.rel target = $region3
  $region8: #{tpu_custom_call.1} parent=0 // loop_exit
    _

</llo_original>
